<compile_context>
chip_gen: v7x
topology: tpu7x:2x2x1
jax: 0.10.0
libtpu: 0.0.40
codegen_flags: <defaults>
</compile_context>

<pallas_src>
import functools

import jax
import jax.numpy as jnp
import numpy as np
from jax.experimental import pallas as pl
from jax.experimental.pallas import tpu as pltpu

LANE = 128


def _leaky_relu(x, slope=0.01):
    # torch.nn.LeakyReLU default negative_slope = 0.01
    return jnp.where(x >= 0, x, slope * x)


def _softplus(x):
    # torch.nn.Softplus (beta=1, threshold=20)
    return jnp.where(x > 20.0, x, jnp.log1p(jnp.exp(jnp.minimum(x, 20.0))))


def _rup(x, m):
    return -(-x // m) * m


def market_regime_kernel(dims, beta_ref, w_ref, x_ref, out_ref):
    (F, H, K, R, o_w1, o_w2, o_wm, o_b2, o_b1, o_bm) = dims
    loff = max(LANE, _rup(H, LANE))   # lane offset of the coef / sigma columns
    rpad = _rup(R, 8)                 # sublane offset of the coef rows in `big`
    beta = beta_ref[0, 0]

    e = x_ref[0:F, 0:H]                                               # (F, H)

    # --- fused layer 1: e @ [w1 | wc1] + [b1 | bc1]                  (F, loff+K)
    #     t1 lives in lanes [0:H], c1 in lanes [loff:loff+K]
    wcat1 = w_ref[o_w1:o_w1 + H, :]
    bcat1 = w_ref[o_b1:o_b1 + 1, :]
    t1c1 = jnp.dot(e, wcat1, preferred_element_type=jnp.float32) + bcat1

    # --- fused layer 2: [w2ᵀ ; wc2ᵀ] @ [t1 | c1] + [b2ᵀ ; bc2ᵀ]      (rpad+R, loff+K)
    wcat2 = w_ref[o_w2:o_w2 + rpad + R, 0:F]
    bcat2 = w_ref[o_b2:o_b2 + rpad + R, 0:1]
    big = jnp.dot(wcat2, t1c1, preferred_element_type=jnp.float32) + bcat2

    h = _leaky_relu(big[0:R, 0:H])                                    # (R, H)   aligned
    coef = big[rpad:rpad + R, loff:loff + K]                          # (R, K)   aligned

    # --- fused heads: h @ [wmu | wsig] + [bmu | bsig]  (mu at lane 0, sigma at lane loff)
    wm = w_ref[o_wm:o_wm + H, :]
    bm = w_ref[o_bm:o_bm + 1, :]
    mb = jnp.dot(h, wm, preferred_element_type=jnp.float32) + bm
    mb_mu = mb[:, 0:1]                                                # (R, 1)
    mb_sigma = _softplus(mb[:, loff:loff + 1])                        # (R, 1)

    # --- factor contraction (K tiny) on the VPU, skipping the MXU
    fmu = x_ref[F:F + 1, 0:K]                                         # (1, K)
    fsig = x_ref[F + 1:F + 2, 0:K]                                    # (1, K)
    ms_mu = mb_mu + jnp.sum(coef * fmu, axis=1, keepdims=True)        # (R, 1)
    ms_sigma = jnp.sqrt(
        mb_sigma * mb_sigma
        + jnp.sum((coef * coef) * (fsig * fsig), axis=1, keepdims=True))  # (R, 1)

    # --- stable ascending argsort of ms_mu via rank counting (matches jnp.argsort;
    #     torch.argsort is unstable only on exact ties — edge case).
    mu_col = ms_mu                                                    # (R, 1)
    mu_row = ms_mu.T                                                  # (1, R)
    row_i = jax.lax.broadcasted_iota(jnp.int32, (R, R), 0)
    col_j = jax.lax.broadcasted_iota(jnp.int32, (R, R), 1)
    before = (mu_row < mu_col) | ((mu_row == mu_col) & (col_j < row_i))
    rank = jnp.sum(before.astype(jnp.int32), axis=1, keepdims=True)   # (R, 1)

    # scatter value i into output lane rank_i directly at full 128-lane width
    lanes = jax.lax.broadcasted_iota(jnp.int32, (R, LANE), 1)
    permT = rank == lanes                                             # (R, 128)
    sorted_mu = jnp.sum(jnp.where(permT, mu_col, 0.0), axis=0, keepdims=True)      # (1,128)
    sorted_sigma = jnp.sum(jnp.where(permT, ms_sigma, 0.0), axis=0, keepdims=True) # (1,128)
    sorted_stack = jnp.concatenate([sorted_mu, sorted_sigma], axis=0)              # (2,128)

    mr_state = x_ref[F + 2:F + 4, 0:LANE]     # (2,128) = [mr_mu ; mr_sigma], 0 beyond R
    out_ref[...] = beta * mr_state + (1.0 - beta) * sorted_stack      # lane-dense store


def pack_weights(params, num_market_feature, H_market, num_market_factor, num_market_regime):
    """Pack all weights/biases ONCE (host-side) into a single (8,128)-aligned f32 slab."""
    F, H, K, R = num_market_feature, H_market, num_market_factor, num_market_regime
    loff = max(LANE, _rup(H, LANE))
    rpad = _rup(R, 8)
    width = loff + K

    o_w1 = 0
    o_w2 = _rup(H, 8)
    o_wm = o_w2 + _rup(rpad + R, 8)
    o_b2 = o_wm + _rup(H, 8)
    o_b1 = o_b2 + _rup(rpad + R, 8)
    o_bm = _rup(o_b1 + 1, 8)
    rows = _rup(o_bm + 1, 8)

    p = {k: np.asarray(v, np.float32) for k, v in params.items()}
    slab = np.zeros((rows, width), np.float32)
    slab[o_w1:o_w1 + H, 0:H] = p["w1"]
    slab[o_w1:o_w1 + H, loff:loff + K] = p["wc1"]
    slab[o_w2:o_w2 + R, 0:F] = p["w2"].T                      # pre-transposed, row-aligned
    slab[o_w2 + rpad:o_w2 + rpad + R, 0:F] = p["wc2"].T
    slab[o_wm:o_wm + H, 0:1] = p["wmu"]
    slab[o_wm:o_wm + H, loff:loff + 1] = p["wsig"]
    slab[o_b2:o_b2 + R, 0] = p["b2"][0]
    slab[o_b2 + rpad:o_b2 + rpad + R, 0] = p["bc2"][0]
    slab[o_b1, 0:H] = p["b1"][0]
    slab[o_b1, loff:loff + K] = p["bc1"][0]
    slab[o_bm, 0] = p["bmu"][0, 0]
    slab[o_bm, loff] = p["bsig"][0, 0]

    dims = (F, H, K, R, o_w1, o_w2, o_wm, o_b2, o_b1, o_bm)
    return jnp.asarray(slab), dims


def make_market_regime_extractor(dims):
    """Build the jitted per-step forward. `dims` comes from pack_weights (static ints)."""
    F, H, K, R = dims[:4]
    assert K >= 1 and R <= LANE
    wd = max(H, K, R, LANE)

    call = pl.pallas_call(
        functools.partial(market_regime_kernel, dims),
        out_shape=jax.ShapeDtypeStruct((2, LANE), jnp.float32),
        in_specs=[pl.BlockSpec(memory_space=pltpu.MemorySpace.SMEM),   # beta
                  pl.BlockSpec(memory_space=pltpu.MemorySpace.VMEM),   # weight slab
                  pl.BlockSpec(memory_space=pltpu.MemorySpace.VMEM)],  # dynamic slab
        out_specs=pl.BlockSpec(memory_space=pltpu.MemorySpace.VMEM),
    )

    @jax.jit
    def forward(wslab, market_factor_mu, market_factor_sigma, e,
                mr_mu_state, mr_sigma_state, beta):
        # One dynamic slab: rows [0:F]=e, F=fmu, F+1=fsig, F+2=mr_mu, F+3=mr_sigma.
        fvec = jnp.stack([market_factor_mu, market_factor_sigma]).astype(jnp.float32)
        mrvec = jnp.stack([mr_mu_state, mr_sigma_state]).astype(jnp.float32)
        dyn = jnp.concatenate([
            jnp.pad(e.astype(jnp.float32), ((0, 0), (0, wd - H))),
            jnp.pad(fvec, ((0, 0), (0, wd - K))),
            jnp.pad(mrvec, ((0, 0), (0, wd - R))),
        ], axis=0)                                               # (F+4, wd)
        beta_arr = jnp.asarray(beta, jnp.float32).reshape(1, 1)
        out = call(beta_arr, wslab, dyn)                         # (2, 128)
        return out[0, :R], out[1, :R]

    return forward


def init_params(key, num_market_feature, H_market, num_market_factor, num_market_regime):
    """Deterministic synthetic init (PyTorch-Linear-like uniform), weights stored (in, out)."""
    def linear(k, fan_in, fan_out):
        kw, kb = jax.random.split(k)
        bound = 1.0 / np.sqrt(fan_in)
        w = jax.random.uniform(kw, (fan_in, fan_out), jnp.float32, -bound, bound)
        b = jax.random.uniform(kb, (1, fan_out), jnp.float32, -bound, bound)
        return w, b

    ks = jax.random.split(key, 6)
    p = {}
    p["w1"], p["b1"] = linear(ks[0], H_market, H_market)                       # h_fc1
    p["w2"], p["b2"] = linear(ks[1], num_market_feature, num_market_regime)    # h_fc2
    p["wmu"], p["bmu"] = linear(ks[2], H_market, 1)                            # mb_mu_fc
    p["wsig"], p["bsig"] = linear(ks[3], H_market, 1)                          # mb_sigma_fc
    p["wc1"], p["bc1"] = linear(ks[4], H_market, num_market_factor)            # coef_fc1
    p["wc2"], p["bc2"] = linear(ks[5], num_market_feature, num_market_regime)  # coef_fc2
    return p


def reference_forward(params, fmu, fsig, e, mr_mu0, mr_sigma0, beta):
    """Pure-JAX reference mirroring the PyTorch forward."""
    t1 = e @ params["w1"] + params["b1"]
    h = _leaky_relu(t1.T @ params["w2"] + params["b2"]).T
    mb_mu = (h @ params["wmu"] + params["bmu"])[:, 0]
    mb_sigma = _softplus(h @ params["wsig"] + params["bsig"])[:, 0]
    c1 = e @ params["wc1"] + params["bc1"]
    coef = (c1.T @ params["wc2"] + params["bc2"]).T
    ms_mu = mb_mu + coef @ fmu
    ms_sigma = jnp.sqrt(mb_sigma ** 2 + (coef ** 2) @ (fsig ** 2))
    idx = jnp.argsort(ms_mu)
    mr_mu = beta * mr_mu0 + (1.0 - beta) * ms_mu[idx]
    mr_sigma = beta * mr_sigma0 + (1.0 - beta) * ms_sigma[idx]
    return mr_mu, mr_sigma


if __name__ == "__main__":
    # Small shapes implied by the module's forward:
    #   e: (num_market_feature, H_market), factors: (num_market_factor,),
    #   regime state: (num_market_regime,)
    num_market_feature = 8
    H_market = 32
    num_market_factor = 4
    num_market_regime = 4
    beta = 0.9

    key = jax.random.PRNGKey(0)
    k_par, k_e, k_fmu, k_fsig, k_mrmu, k_mrsig = jax.random.split(key, 6)

    params = init_params(k_par, num_market_feature, H_market,
                         num_market_factor, num_market_regime)
    e = jax.random.normal(k_e, (num_market_feature, H_market), jnp.float32)
    market_factor_mu = jax.random.normal(k_fmu, (num_market_factor,), jnp.float32)
    market_factor_sigma = jax.random.normal(k_fsig, (num_market_factor,), jnp.float32)
    # self.mr_mu / self.mr_sigma buffers (torch.randn in __init__)
    mr_mu_state = jax.random.normal(k_mrmu, (num_market_regime,), jnp.float32)
    mr_sigma_state = jax.random.normal(k_mrsig, (num_market_regime,), jnp.float32)

    # --- model "init": pack weights once, build the jitted forward once -----------
    wslab, dims = pack_weights(params, num_market_feature, H_market,
                               num_market_factor, num_market_regime)
    forward = make_market_regime_extractor(dims)

    # --- per-call hot path ---------------------------------------------------------
    mr_mu, mr_sigma = forward(wslab, market_factor_mu, market_factor_sigma, e,
                              mr_mu_state, mr_sigma_state, beta)
    jax.block_until_ready((mr_mu, mr_sigma))

    ref_mu, ref_sigma = reference_forward(
        params, market_factor_mu, market_factor_sigma, e,
        mr_mu_state, mr_sigma_state, beta)
    np.testing.assert_allclose(np.asarray(mr_mu), np.asarray(ref_mu), rtol=1e-3, atol=1e-3)
    np.testing.assert_allclose(np.asarray(mr_sigma), np.asarray(ref_sigma), rtol=1e-3, atol=1e-3)

    print("KERNEL_OK")
</pallas_src>

<mosaic_0001>
module attributes {stable_mosaic.version = 11 : i64} {
  func.func @market_regime_kernel(%arg0: memref<1x1xf32, #tpu.memory_space<smem>>, %arg1: memref<112x132xf32, #tpu.memory_space<vmem>>, %arg2: memref<12x128xf32, #tpu.memory_space<vmem>>, %arg3: memref<2x128xf32, #tpu.memory_space<vmem>>) attributes {dimension_semantics = [], scalar_prefetch = 0 : i64, scratch_operands = 0 : i64, tpu.core_type = #tpu.core_type<tc>} {
    %c0 = arith.constant 0 : index
    %c0_0 = arith.constant 0 : index
    %0 = memref.load %arg0[%c0, %c0_0] : memref<1x1xf32, #tpu.memory_space<smem>>
    %c0_1 = arith.constant 0 : index
    %c0_2 = arith.constant 0 : index
    %1 = vector.load %arg2[%c0_1, %c0_2] : memref<12x128xf32, #tpu.memory_space<vmem>>, vector<8x32xf32>
    %c0_3 = arith.constant 0 : index
    %c0_4 = arith.constant 0 : index
    %2 = vector.load %arg1[%c0_3, %c0_4] : memref<112x132xf32, #tpu.memory_space<vmem>>, vector<32x132xf32>
    %c96 = arith.constant 96 : index
    %c0_5 = arith.constant 0 : index
    %3 = vector.load %arg1[%c96, %c0_5] : memref<112x132xf32, #tpu.memory_space<vmem>>, vector<1x132xf32>
    %cst = arith.constant dense<0.000000e+00> : vector<8x132xf32>
    %4 = tpu.matmul %1, %2, %cst {dimension_numbers = #tpu.dot_dimension_numbers<[1], [0], [0], [1], [0, 0, 1, 1], [], []>} : vector<8x32xf32>, vector<32x132xf32>, vector<8x132xf32> -> vector<8x132xf32>
    %5 = vector.broadcast %3 : vector<1x132xf32> to vector<8x132xf32>
    %6 = arith.addf %4, %5 : vector<8x132xf32>
    %c32 = arith.constant 32 : index
    %c0_6 = arith.constant 0 : index
    %7 = vector.load %arg1[%c32, %c0_6] : memref<112x132xf32, #tpu.memory_space<vmem>>, vector<12x8xf32>
    %c80 = arith.constant 80 : index
    %c0_7 = arith.constant 0 : index
    %8 = vector.load %arg1[%c80, %c0_7] : memref<112x132xf32, #tpu.memory_space<vmem>>, vector<12x1xf32>
    %cst_8 = arith.constant dense<0.000000e+00> : vector<12x132xf32>
    %9 = tpu.matmul %7, %6, %cst_8 {dimension_numbers = #tpu.dot_dimension_numbers<[1], [0], [0], [1], [0, 0, 1, 1], [], []>} : vector<12x8xf32>, vector<8x132xf32>, vector<12x132xf32> -> vector<12x132xf32>
    %10 = vector.broadcast %8 : vector<12x1xf32> to vector<12x132xf32>
    %11 = arith.addf %9, %10 : vector<12x132xf32>
    %12 = vector.extract_strided_slice %11 {offsets = [0, 0], sizes = [4, 32], strides = [1, 1]} : vector<12x132xf32> to vector<4x32xf32>
    %cst_9 = arith.constant 0.000000e+00 : f32
    %13 = vector.broadcast %cst_9 : f32 to vector<4x32xf32>
    %14 = arith.cmpf oge, %12, %13 : vector<4x32xf32>
    %cst_10 = arith.constant 0.00999999977 : f32
    %15 = vector.broadcast %cst_10 : f32 to vector<4x32xf32>
    %16 = arith.mulf %15, %12 : vector<4x32xf32>
    %17 = arith.select %14, %12, %16 : vector<4x32xi1>, vector<4x32xf32>
    %18 = vector.extract_strided_slice %11 {offsets = [8, 128], sizes = [4, 4], strides = [1, 1]} : vector<12x132xf32> to vector<4x4xf32>
    %c48 = arith.constant 48 : index
    %c0_11 = arith.constant 0 : index
    %19 = vector.load %arg1[%c48, %c0_11] : memref<112x132xf32, #tpu.memory_space<vmem>>, vector<32x132xf32>
    %c104 = arith.constant 104 : index
    %c0_12 = arith.constant 0 : index
    %20 = vector.load %arg1[%c104, %c0_12] : memref<112x132xf32, #tpu.memory_space<vmem>>, vector<1x132xf32>
    %cst_13 = arith.constant dense<0.000000e+00> : vector<4x132xf32>
    %21 = tpu.matmul %17, %19, %cst_13 {dimension_numbers = #tpu.dot_dimension_numbers<[1], [0], [0], [1], [0, 0, 1, 1], [], []>} : vector<4x32xf32>, vector<32x132xf32>, vector<4x132xf32> -> vector<4x132xf32>
    %22 = vector.broadcast %20 : vector<1x132xf32> to vector<4x132xf32>
    %23 = arith.addf %21, %22 : vector<4x132xf32>
    %24 = vector.extract_strided_slice %23 {offsets = [0, 0], sizes = [4, 1], strides = [1, 1]} : vector<4x132xf32> to vector<4x1xf32>
    %25 = vector.extract_strided_slice %23 {offsets = [0, 128], sizes = [4, 1], strides = [1, 1]} : vector<4x132xf32> to vector<4x1xf32>
    %cst_14 = arith.constant 2.000000e+01 : f32
    %26 = vector.broadcast %cst_14 : f32 to vector<4x1xf32>
    %27 = arith.cmpf ogt, %25, %26 : vector<4x1xf32>
    %cst_15 = arith.constant 2.000000e+01 : f32
    %28 = vector.broadcast %cst_15 : f32 to vector<4x1xf32>
    %29 = arith.minimumf %25, %28 : vector<4x1xf32>
    %30 = math.exp %29 : vector<4x1xf32>
    %31 = math.log1p %30 : vector<4x1xf32>
    %32 = arith.select %27, %25, %31 : vector<4x1xi1>, vector<4x1xf32>
    %c8 = arith.constant 8 : index
    %c0_16 = arith.constant 0 : index
    %33 = vector.load %arg2[%c8, %c0_16] : memref<12x128xf32, #tpu.memory_space<vmem>>, vector<1x4xf32>
    %c9 = arith.constant 9 : index
    %c0_17 = arith.constant 0 : index
    %34 = vector.load %arg2[%c9, %c0_17] : memref<12x128xf32, #tpu.memory_space<vmem>>, vector<1x4xf32>
    %35 = vector.broadcast %33 : vector<1x4xf32> to vector<4x4xf32>
    %36 = arith.mulf %18, %35 : vector<4x4xf32>
    %cst_18 = arith.constant dense<0.000000e+00> : vector<4xf32>
    %37 = vector.multi_reduction <add>, %36, %cst_18 [1] : vector<4x4xf32> to vector<4xf32>
    %38 = vector.shape_cast %37 : vector<4xf32> to vector<4x1xf32>
    %39 = arith.addf %24, %38 : vector<4x1xf32>
    %40 = arith.mulf %32, %32 : vector<4x1xf32>
    %41 = arith.mulf %18, %18 : vector<4x4xf32>
    %42 = arith.mulf %34, %34 : vector<1x4xf32>
    %43 = vector.broadcast %42 : vector<1x4xf32> to vector<4x4xf32>
    %44 = arith.mulf %41, %43 : vector<4x4xf32>
    %cst_19 = arith.constant dense<0.000000e+00> : vector<4xf32>
    %45 = vector.multi_reduction <add>, %44, %cst_19 [1] : vector<4x4xf32> to vector<4xf32>
    %46 = vector.shape_cast %45 : vector<4xf32> to vector<4x1xf32>
    %47 = arith.addf %40, %46 : vector<4x1xf32>
    %48 = math.sqrt %47 : vector<4x1xf32>
    %49 = tpu.transpose %39, [1, 0] : vector<4x1xf32> -> vector<1x4xf32>
    %50 = tpu.iota {dimensions = array<i32: 0>} : vector<4x4xi32>
    %51 = tpu.iota {dimensions = array<i32: 1>} : vector<4x4xi32>
    %52 = vector.broadcast %49 : vector<1x4xf32> to vector<4x4xf32>
    %53 = vector.broadcast %39 : vector<4x1xf32> to vector<4x4xf32>
    %54 = arith.cmpf olt, %52, %53 : vector<4x4xf32>
    %55 = vector.broadcast %49 : vector<1x4xf32> to vector<4x4xf32>
    %56 = vector.broadcast %39 : vector<4x1xf32> to vector<4x4xf32>
    %57 = arith.cmpf oeq, %55, %56 : vector<4x4xf32>
    %58 = arith.cmpi slt, %51, %50 : vector<4x4xi32>
    %59 = arith.andi %57, %58 : vector<4x4xi1>
    %60 = arith.ori %54, %59 : vector<4x4xi1>
    %61 = arith.extui %60 : vector<4x4xi1> to vector<4x4xi32>
    %cst_20 = arith.constant dense<0> : vector<4xi32>
    %62 = vector.multi_reduction <add>, %61, %cst_20 [1] : vector<4x4xi32> to vector<4xi32>
    %63 = vector.shape_cast %62 : vector<4xi32> to vector<4x1xi32>
    %64 = tpu.iota {dimensions = array<i32: 1>} : vector<4x128xi32>
    %65 = vector.broadcast %63 : vector<4x1xi32> to vector<4x128xi32>
    %66 = arith.cmpi eq, %65, %64 : vector<4x128xi32>
    %cst_21 = arith.constant 0.000000e+00 : f32
    %67 = vector.shape_cast %39 : vector<4x1xf32> to vector<4x1xf32>
    %68 = vector.broadcast %67 : vector<4x1xf32> to vector<4x128xf32>
    %69 = vector.broadcast %cst_21 : f32 to vector<4x128xf32>
    %70 = arith.select %66, %68, %69 : vector<4x128xi1>, vector<4x128xf32>
    %cst_22 = arith.constant dense<0.000000e+00> : vector<128xf32>
    %71 = vector.multi_reduction <add>, %70, %cst_22 [0] : vector<4x128xf32> to vector<128xf32>
    %72 = vector.shape_cast %71 : vector<128xf32> to vector<1x128xf32>
    %cst_23 = arith.constant 0.000000e+00 : f32
    %73 = vector.shape_cast %48 : vector<4x1xf32> to vector<4x1xf32>
    %74 = vector.broadcast %73 : vector<4x1xf32> to vector<4x128xf32>
    %75 = vector.broadcast %cst_23 : f32 to vector<4x128xf32>
    %76 = arith.select %66, %74, %75 : vector<4x128xi1>, vector<4x128xf32>
    %cst_24 = arith.constant dense<0.000000e+00> : vector<128xf32>
    %77 = vector.multi_reduction <add>, %76, %cst_24 [0] : vector<4x128xf32> to vector<128xf32>
    %78 = vector.shape_cast %77 : vector<128xf32> to vector<1x128xf32>
    %79 = tpu.concatenate %72, %78 in 0 : vector<1x128xf32>, vector<1x128xf32> -> vector<2x128xf32>
    %c10 = arith.constant 10 : index
    %c0_25 = arith.constant 0 : index
    %80 = vector.load %arg2[%c10, %c0_25] : memref<12x128xf32, #tpu.memory_space<vmem>>, vector<2x128xf32>
    %81 = vector.broadcast %0 : f32 to vector<2x128xf32>
    %82 = arith.mulf %81, %80 : vector<2x128xf32>
    %cst_26 = arith.constant 1.000000e+00 : f32
    %83 = arith.subf %cst_26, %0 : f32
    %84 = vector.broadcast %83 : f32 to vector<2x128xf32>
    %85 = arith.mulf %84, %79 : vector<2x128xf32>
    %86 = arith.addf %82, %85 : vector<2x128xf32>
    %c0_27 = arith.constant 0 : index
    %c0_28 = arith.constant 0 : index
    %87 = vector.load %arg3[%c0_27, %c0_28] : memref<2x128xf32, #tpu.memory_space<vmem>>, vector<2x128xf32>
    tpu.vector_store %arg3[%c0_27, %c0_28], %86 {strides = array<i32>} : memref<2x128xf32, #tpu.memory_space<vmem>>, vector<2x128xf32>,
    return
  }
}

</mosaic_0001>

<llo_original>
// kernel: forward.1
$region0: #{forward.1}
  #allocation0 [shape = 'u32[]', space=smem, size = 0x4, offset = 0x4, fixed_abs, tag = 'smem constant byte address 0x4 - core index']
  #allocation1 [shape = 'u32[144,128]{1,0:T(1,128)}', space=vmem, size = 0x12000, scoped, tag = 'internal scratch']
  #allocation2 [shape = 'f32[1,1]{1,0:T(1,128)S(6)}', space=smem, size = 0x200, scoped, tag = 'scoped memory for forward.1']
  %s0 = inlined_call_operand.<no memory space> [shape: f32[1,1], index: 0, kind: input, shape index: {}]
  %s1 = inlined_call_operand.vmem [shape: f32[112,132], index: 1, kind: input, shape index: {}]
  %s2 = inlined_call_operand.vmem [shape: f32[12,128], index: 2, kind: input, shape index: {}]
  %s3 = inlined_call_operand.vmem [shape: f32[2,128], index: 3, kind: output, shape index: {}]
  %s4 = sld [smem:[#allocation0]]
  $region22: #{forward.1} parent=0
    _
  %s6 = ssub.s32 1, %s4
  %s7 = scalar_select 0, %s6, %s4
  %8 = sst [smem:[#allocation2]] %s0
  // Predicated region
  $region2: #{forward.1} parent=0 // pred_check
    _
  $region3: #{forward.1} parent=0 // pred_check_branch
    %10 = sbr.rel (0) target = $region5
  $region4: #{forward.1} parent=0 // pred_region
    _
  $region5: #{forward.1} parent=0 // pred_fallthru
    _
  // Predicated region
  $region6: #{forward.1} parent=0 // pred_check
    _
  $region7: #{forward.1} parent=0 // pred_check_branch
    %12 = sbr.rel (0) target = $region9
  $region8: #{forward.1} parent=0 // pred_region
    _
  $region9: #{forward.1} parent=0 // pred_fallthru
    _
  // Predicated region
  $region10: #{forward.1} parent=0 // pred_check
    _
  $region11: #{forward.1} parent=0 // pred_check_branch
    %14 = sbr.rel (0) target = $region13
  $region12: #{forward.1} parent=0 // pred_region
    _
  $region13: #{forward.1} parent=0 // pred_fallthru
    _
  %s15 = sld [smem:[#allocation2]]
  %v16 = vld [vmem:[%s2] sm:$0xff]
  %v17 = vld [vmem:[%s1] sm:$0xff]
  %v18 = vld [vmem:[%s1 + $0x8] sm:$0xff]
  %v19 = vld [vmem:[%s1 + $0x10] sm:$0xff]
  %v20 = vld [vmem:[%s1 + $0x18] sm:$0xff]
  %v21 = vld [vmem:[%s1 + $0x20] sm:$0xff]
  %v22 = vld [vmem:[%s1 + $0x28] sm:$0xff]
  %v23 = vld [vmem:[%s1 + $0x30] sm:$0xff]
  %v24 = vld [vmem:[%s1 + $0x38] sm:$0xff]
  %s25 = scalar_lea.vmem %s1, 192
  %v26 = vld [vmem:[%s25] ss:$8 sm:$0x3]
  %v28 = vlaneseq
  %v29 = vshrl.u32 %v28, 7
  %v30 = vsub.s32 0, %v29
  %v31 = vrot.slane %v26, %v30
  %v32 = vlaneseq
  %v33 = vshrl.u32 %v32, 7
  %v34 = vsub.s32 1, %v33
  %v35 = vrot.slane %v26, %v34
  %vm38 = vcmask 261120
  %v40 = vsel %vm38, %v16, 0
  %42 = vmatprep.subr.mxu0 %v18
  %43 = vmatpush1.msra.mxu0 %v17
  %44 = vmatprep.subr.mxu0 %v20
  %45 = vmatpush1.msra.mxu0 %v19
  %46 = vmatprep.subr.mxu0 %v22
  %47 = vmatpush1.msra.mxu0 %v21
  %48 = vmatprep.subr.mxu0 %v24
  %49 = vmatpush1.msra.mxu0 %v23
  %50 = vmatprep.subr.mxu0 0.0
  %51 = vmatpush1.msra.mxu0 0.0
  %52 = vmatprep.subr.mxu0 0.0
  %53 = vmatpush1.msra.mxu0 0.0
  %54 = vmatprep.subr.mxu0 0.0
  %55 = vmatpush1.msra.mxu0 0.0
  %56 = vmatprep.subr.mxu0 0.0
  %57 = vmatpush1.msra.mxu0 0.0
  %58 = vmatprep.subr.mxu0 0.0
  %59 = vmatpush1.msra.mxu0 0.0
  %60 = vmatprep.subr.mxu0 0.0
  %61 = vmatpush1.msra.mxu0 0.0
  %62 = vmatprep.subr.mxu0 0.0
  %63 = vmatpush1.msra.mxu0 0.0
  %64 = vmatprep.subr.mxu0 0.0
  %65 = vmatpush1.msra.mxu0 0.0
  %66 = vmatprep.subr.mxu0 0.0
  %67 = vmatpush1.msra.mxu0 0.0
  %68 = vmatprep.subr.mxu0 0.0
  %69 = vmatpush1.msra.mxu0 0.0
  %70 = vmatprep.subr.mxu0 0.0
  %71 = vmatpush1.msra.mxu0 0.0
  %72 = vmatprep.subr.mxu0 0.0
  %73 = vmatpush1.msra.mxu0 0.0
  %74 = vmatprep.subr.mxu0 0.0
  %75 = vmatpush1.msra.mxu0 0.0
  %76 = vmatprep.subr.mxu0 0.0
  %77 = vmatpush1.msra.mxu0 0.0
  %78 = vmatprep.subr.mxu0 0.0
  %79 = vmatpush1.msra.mxu0 0.0
  %80 = vmatprep.subr.mxu0 0.0
  %81 = vmatpush1.msra.mxu0 0.0
  %82 = vmatprep.subr.mxu0 0.0
  %83 = vmatpush1.msra.mxu0 0.0
  %84 = vmatprep.subr.mxu0 0.0
  %85 = vmatpush1.msra.mxu0 0.0
  %86 = vmatprep.subr.mxu0 0.0
  %87 = vmatpush1.msra.mxu0 0.0
  %88 = vmatprep.subr.mxu0 0.0
  %89 = vmatpush1.msra.mxu0 0.0
  %90 = vmatprep.subr.mxu0 0.0
  %91 = vmatpush1.msra.mxu0 0.0
  %92 = vmatprep.subr.mxu0 0.0
  %93 = vmatpush1.msra.mxu0 0.0
  %94 = vmatprep.subr.mxu0 0.0
  %95 = vmatpush1.msra.mxu0 0.0
  %96 = vmatprep.subr.mxu0 0.0
  %97 = vmatpush1.msra.mxu0 0.0
  %98 = vmatprep.subr.mxu0 0.0
  %99 = vmatpush1.msra.mxu0 0.0
  %100 = vmatprep.subr.mxu0 0.0
  %101 = vmatpush1.msra.mxu0 0.0
  %102 = vmatprep.subr.mxu0 0.0
  %103 = vmatpush1.msra.mxu0 0.0
  %104 = vmatprep.subr.mxu0 0.0
  %105 = vmatpush1.msra.mxu0 0.0
  %106 = vmatprep.mubr.f32.mxu0 0.0
  %107 = vmatmul.mubr.f32.gmra.mrb[0].mxu0 %v40
  %v108 = vpop.f32.mrb[0].mxu0
  %v109 = vadd.f32 %v31, %v108
  %v110 = vpop.f32.mrb[0].mxu0
  %v111 = vadd.f32 %v35, %v110
  %112 = vdwg.mxu0
  %v113 = vld [vmem:[%s1 + $0x40] sm:$0xff]
  %v114 = vld [vmem:[%s1 + $0x50] sm:$0xf]
  %v115 = vld [vmem:[%s1 + $0xa0] sm:$0xff]
  %v116 = vld [vmem:[%s1 + $0xb0] sm:$0xf]
  %118 = vset.pattern.permute.xlu0 0
  %119 = vperm.xlu0 %118, %v115
  %v120 = vpop.permute.xlu0 %119
  %123 = vset.pattern.permute.xlu0 0
  %124 = vperm.xlu0 %123, %v116
  %v125 = vpop.permute.xlu0 %124
  %vm127 = vcmask 64512
  %v129 = vsel %vm127, %v113, 0
  %v132 = vsel %vm127, %v114, 0
  %134 = vmatprep.subr.mxu0 %v111
  %135 = vmatpush1.msra.mxu0 %v109
  %136 = vmatprep.subr.mxu0 0.0
  %137 = vmatpush1.msra.mxu0 0.0
  %138 = vmatprep.subr.mxu0 0.0
  %139 = vmatpush1.msra.mxu0 0.0
  %140 = vmatprep.subr.mxu0 0.0
  %141 = vmatpush1.msra.mxu0 0.0
  %142 = vmatprep.subr.mxu0 0.0
  %143 = vmatpush1.msra.mxu0 0.0
  %144 = vmatprep.subr.mxu0 0.0
  %145 = vmatpush1.msra.mxu0 0.0
  %146 = vmatprep.subr.mxu0 0.0
  %147 = vmatpush1.msra.mxu0 0.0
  %148 = vmatprep.subr.mxu0 0.0
  %149 = vmatpush1.msra.mxu0 0.0
  %150 = vmatprep.subr.mxu0 0.0
  %151 = vmatpush1.msra.mxu0 0.0
  %152 = vmatprep.subr.mxu0 0.0
  %153 = vmatpush1.msra.mxu0 0.0
  %154 = vmatprep.subr.mxu0 0.0
  %155 = vmatpush1.msra.mxu0 0.0
  %156 = vmatprep.subr.mxu0 0.0
  %157 = vmatpush1.msra.mxu0 0.0
  %158 = vmatprep.subr.mxu0 0.0
  %159 = vmatpush1.msra.mxu0 0.0
  %160 = vmatprep.subr.mxu0 0.0
  %161 = vmatpush1.msra.mxu0 0.0
  %162 = vmatprep.subr.mxu0 0.0
  %163 = vmatpush1.msra.mxu0 0.0
  %164 = vmatprep.subr.mxu0 0.0
  %165 = vmatpush1.msra.mxu0 0.0
  %166 = vmatprep.subr.mxu0 0.0
  %167 = vmatpush1.msra.mxu0 0.0
  %168 = vmatprep.subr.mxu0 0.0
  %169 = vmatpush1.msra.mxu0 0.0
  %170 = vmatprep.subr.mxu0 0.0
  %171 = vmatpush1.msra.mxu0 0.0
  %172 = vmatprep.subr.mxu0 0.0
  %173 = vmatpush1.msra.mxu0 0.0
  %174 = vmatprep.subr.mxu0 0.0
  %175 = vmatpush1.msra.mxu0 0.0
  %176 = vmatprep.subr.mxu0 0.0
  %177 = vmatpush1.msra.mxu0 0.0
  %178 = vmatprep.subr.mxu0 0.0
  %179 = vmatpush1.msra.mxu0 0.0
  %180 = vmatprep.subr.mxu0 0.0
  %181 = vmatpush1.msra.mxu0 0.0
  %182 = vmatprep.subr.mxu0 0.0
  %183 = vmatpush1.msra.mxu0 0.0
  %184 = vmatprep.subr.mxu0 0.0
  %185 = vmatpush1.msra.mxu0 0.0
  %186 = vmatprep.subr.mxu0 0.0
  %187 = vmatpush1.msra.mxu0 0.0
  %188 = vmatprep.subr.mxu0 0.0
  %189 = vmatpush1.msra.mxu0 0.0
  %190 = vmatprep.subr.mxu0 0.0
  %191 = vmatpush1.msra.mxu0 0.0
  %192 = vmatprep.subr.mxu0 0.0
  %193 = vmatpush1.msra.mxu0 0.0
  %194 = vmatprep.subr.mxu0 0.0
  %195 = vmatpush1.msra.mxu0 0.0
  %196 = vmatprep.subr.mxu0 0.0
  %197 = vmatpush1.msra.mxu0 0.0
  %198 = vmatprep.mubr.f32.mxu0 0.0
  %199 = vmatmul.mubr.f32.gmra.mrb[0].mxu0 %v129
  %v200 = vpop.f32.mrb[0].mxu0
  %v201 = vadd.f32 %v120, %v200
  %v202 = vpop.f32.mrb[0].mxu0
  %203 = vmatprep.mubr.f32.mxu0 0.0
  %204 = vmatmul.mubr.f32.gmra.mrb[0].mxu0 %v132
  %v205 = vpop.f32.mrb[0].mxu0
  %v206 = vpop.f32.mrb[0].mxu0
  %v207 = vadd.f32 %v125, %v206
  %208 = vdwg.mxu0
  %vm209 = vcmp.ge.f32.partialorder %v201, 0.0
  %v210 = vmul.f32 %v201, 0.01
  %v211 = vsel %vm209, %v201, %v210
  %v212 = vld [vmem:[%s1 + $0x60] sm:$0xff]
  %v213 = vld [vmem:[%s1 + $0x68] sm:$0xff]
  %v214 = vld [vmem:[%s1 + $0x70] sm:$0xff]
  %v215 = vld [vmem:[%s1 + $0x78] sm:$0xff]
  %v216 = vld [vmem:[%s1 + $0x80] sm:$0xff]
  %v217 = vld [vmem:[%s1 + $0x88] sm:$0xff]
  %v218 = vld [vmem:[%s1 + $0x90] sm:$0xff]
  %v219 = vld [vmem:[%s1 + $0x98] sm:$0xff]
  %s220 = scalar_lea.vmem %s1, 208
  %v221 = vld [vmem:[%s220] ss:$8 sm:$0x3]
  %v223 = vlaneseq
  %v224 = vshrl.u32 %v223, 7
  %v225 = vsub.s32 0, %v224
  %v226 = vrot.slane %v221, %v225
  %v227 = vlaneseq
  %v228 = vshrl.u32 %v227, 7
  %v229 = vsub.s32 1, %v228
  %v230 = vrot.slane %v221, %v229
  %v234 = vsel %vm38, %v211, 0
  %236 = vmatprep.subr.mxu0 %v213
  %237 = vmatpush1.msra.mxu0 %v212
  %238 = vmatprep.subr.mxu0 %v215
  %239 = vmatpush1.msra.mxu0 %v214
  %240 = vmatprep.subr.mxu0 %v217
  %241 = vmatpush1.msra.mxu0 %v216
  %242 = vmatprep.subr.mxu0 %v219
  %243 = vmatpush1.msra.mxu0 %v218
  %244 = vmatprep.subr.mxu0 0.0
  %245 = vmatpush1.msra.mxu0 0.0
  %246 = vmatprep.subr.mxu0 0.0
  %247 = vmatpush1.msra.mxu0 0.0
  %248 = vmatprep.subr.mxu0 0.0
  %249 = vmatpush1.msra.mxu0 0.0
  %250 = vmatprep.subr.mxu0 0.0
  %251 = vmatpush1.msra.mxu0 0.0
  %252 = vmatprep.subr.mxu0 0.0
  %253 = vmatpush1.msra.mxu0 0.0
  %254 = vmatprep.subr.mxu0 0.0
  %255 = vmatpush1.msra.mxu0 0.0
  %256 = vmatprep.subr.mxu0 0.0
  %257 = vmatpush1.msra.mxu0 0.0
  %258 = vmatprep.subr.mxu0 0.0
  %259 = vmatpush1.msra.mxu0 0.0
  %260 = vmatprep.subr.mxu0 0.0
  %261 = vmatpush1.msra.mxu0 0.0
  %262 = vmatprep.subr.mxu0 0.0
  %263 = vmatpush1.msra.mxu0 0.0
  %264 = vmatprep.subr.mxu0 0.0
  %265 = vmatpush1.msra.mxu0 0.0
  %266 = vmatprep.subr.mxu0 0.0
  %267 = vmatpush1.msra.mxu0 0.0
  %268 = vmatprep.subr.mxu0 0.0
  %269 = vmatpush1.msra.mxu0 0.0
  %270 = vmatprep.subr.mxu0 0.0
  %271 = vmatpush1.msra.mxu0 0.0
  %272 = vmatprep.subr.mxu0 0.0
  %273 = vmatpush1.msra.mxu0 0.0
  %274 = vmatprep.subr.mxu0 0.0
  %275 = vmatpush1.msra.mxu0 0.0
  %276 = vmatprep.subr.mxu0 0.0
  %277 = vmatpush1.msra.mxu0 0.0
  %278 = vmatprep.subr.mxu0 0.0
  %279 = vmatpush1.msra.mxu0 0.0
  %280 = vmatprep.subr.mxu0 0.0
  %281 = vmatpush1.msra.mxu0 0.0
  %282 = vmatprep.subr.mxu0 0.0
  %283 = vmatpush1.msra.mxu0 0.0
  %284 = vmatprep.subr.mxu0 0.0
  %285 = vmatpush1.msra.mxu0 0.0
  %286 = vmatprep.subr.mxu0 0.0
  %287 = vmatpush1.msra.mxu0 0.0
  %288 = vmatprep.subr.mxu0 0.0
  %289 = vmatpush1.msra.mxu0 0.0
  %290 = vmatprep.subr.mxu0 0.0
  %291 = vmatpush1.msra.mxu0 0.0
  %292 = vmatprep.subr.mxu0 0.0
  %293 = vmatpush1.msra.mxu0 0.0
  %294 = vmatprep.subr.mxu0 0.0
  %295 = vmatpush1.msra.mxu0 0.0
  %296 = vmatprep.subr.mxu0 0.0
  %297 = vmatpush1.msra.mxu0 0.0
  %298 = vmatprep.subr.mxu0 0.0
  %299 = vmatpush1.msra.mxu0 0.0
  %300 = vmatprep.mubr.f32.mxu0 0.0
  %301 = vmatmul.mubr.f32.gmra.mrb[0].mxu0 %v234
  %v302 = vpop.f32.mrb[0].mxu0
  %v303 = vadd.f32 %v226, %v302
  %v304 = vpop.f32.mrb[0].mxu0
  %v305 = vadd.f32 %v230, %v304
  %306 = vdwg.mxu0
  %vm307 = vcmp.gt.f32.partialorder %v305, 20.0
  %v308 = vmin.f32 %v305, 20.0
  %v309 = vmul.f32 %v308, 1.442695
  %v310 = vpow.pop %v309
  %v311 = vadd.f32 %v310, 1.0
  %v312 = vlog2.pop %v311
  %v313 = vmul.f32 %v312, 0.6931472
  %v314 = vmul.f32 -0.5, %v310
  %v315 = vadd.f32 %v314, 1.0
  %v316 = vmul.f32 %v315, %v310
  %v317 = vand.u32 2147483647, %v310
  %vm318 = vcmp.lt.f32.partialorder %v317, 0.0004427343
  %v319 = vsel %vm318, %v316, %v313
  %v320 = vsel %vm307, %v305, %v319
  %v321 = vld [vmem:[%s2 + $0x8] sm:$0x1]
  %v322 = vld [vmem:[%s2 + $0x9] sm:$0x1]
  %v323 = vlaneseq
  %v324 = vshrl.u32 %v323, 7
  %v325 = vsub.s32 0, %v324
  %v326 = vrot.slane %v321, %v325
  %v327 = vmul.f32 %v207, %v326
  %vm328 = vcmask 27648
  %v329 = vsel %vm328, %v327, 0.0
  %330 = vadd.xlane.f32.xlu0 %v329
  %v331 = vpop.xlane.xlu0 %330
  %v332 = vadd.f32 %v303, %v331
  %v333 = vmul.f32 %v320, %v320
  %v334 = vmul.f32 %v207, %v207
  %v335 = vmul.f32 %v322, %v322
  %v336 = vlaneseq
  %v337 = vshrl.u32 %v336, 7
  %v338 = vsub.s32 0, %v337
  %v339 = vrot.slane %v335, %v338
  %v340 = vmul.f32 %v334, %v339
  %v341 = vsel %vm328, %v340, 0.0
  %342 = vadd.xlane.f32.xlu0 %v341
  %v343 = vpop.xlane.xlu0 %342
  %v344 = vadd.f32 %v333, %v343
  %v345 = vrsqrt.pop %v344
  %v346 = vmul.f32 %v344, %v345
  %vm347 = vcmp.eq.f32.partialorder %v344, inf
  %v348 = vsel %vm347, %v344, %v346
  %vm349 = vcmp.eq.f32.partialorder %v344, 0.0
  %v350 = vand.u32 %v344, 2147483648
  %v351 = vsel %vm349, %v350, %v348
  %352 = vxpose.xlu0.b32.start [1/16] %v332, 128
  %353 = vxpose.xlu0.b32.cont [2/16] 0.0, 128
  %354 = vxpose.xlu0.b32.cont [3/16] 0.0, 128
  %355 = vxpose.xlu0.b32.cont [4/16] 0.0, 128
  %356 = vxpose.xlu0.b32.cont [5/16] 0.0, 128
  %357 = vxpose.xlu0.b32.cont [6/16] 0.0, 128
  %358 = vxpose.xlu0.b32.cont [7/16] 0.0, 128
  %359 = vxpose.xlu0.b32.cont [8/16] 0.0, 128
  %360 = vxpose.xlu0.b32.cont [9/16] 0.0, 128
  %361 = vxpose.xlu0.b32.cont [10/16] 0.0, 128
  %362 = vxpose.xlu0.b32.cont [11/16] 0.0, 128
  %363 = vxpose.xlu0.b32.cont [12/16] 0.0, 128
  %364 = vxpose.xlu0.b32.cont [13/16] 0.0, 128
  %365 = vxpose.xlu0.b32.cont [14/16] 0.0, 128
  %366 = vxpose.xlu0.b32.cont [15/16] 0.0, 128
  %367 = vxpose.xlu0.b32.end [16/16] 0.0, 128
  %v368 = vpop.trf.xlu0
  %v369 = vpop.trf.xlu0
  %v370 = vpop.trf.xlu0
  %v371 = vpop.trf.xlu0
  %v372 = vpop.trf.xlu0
  %v373 = vpop.trf.xlu0
  %v374 = vpop.trf.xlu0
  %v375 = vpop.trf.xlu0
  %v376 = vpop.trf.xlu0
  %v377 = vpop.trf.xlu0
  %v378 = vpop.trf.xlu0
  %v379 = vpop.trf.xlu0
  %v380 = vpop.trf.xlu0
  %v381 = vpop.trf.xlu0
  %v382 = vpop.trf.xlu0
  %v383 = vpop.trf.xlu0
  %v384 = vlaneseq
  %v385 = vshrl.u32 %v384, 7
  %v386 = vlaneseq
  %v387 = vand.u32 %v386, 127
  %v388 = vlaneseq
  %v389 = vshrl.u32 %v388, 7
  %v390 = vsub.s32 0, %v389
  %v391 = vrot.slane %v368, %v390
  %393 = vset.pattern.permute.xlu0 0
  %394 = vperm.xlu0 %393, %v332
  %v395 = vpop.permute.xlu0 %394
  %vm397 = vcmp.lt.f32.partialorder %v391, %v395
  %vm398 = vcmp.eq.f32.partialorder %v391, %v395
  %vm399 = vcmp.lt.s32.totalorder %v387, %v385
  %vm400 = vmand %vm398, %vm399
  %vm401 = vmor %vm397, %vm400
  %v402 = vsel %vm401, 1, 0
  %v403 = vsel %vm328, %v402, 0
  %v404 = vand.u32 %v403, 65535
  %v405 = vshrl.u32 %v403, 16
  %v406 = vcvt.s32.f32 %v404
  %v407 = vcvt.s32.f32 %v405
  %408 = vadd.xlane.f32.xlu0 %v406
  %v409 = vpop.xlane.xlu0 %408
  %410 = vadd.xlane.f32.xlu0 %v407
  %v411 = vpop.xlane.xlu0 %410
  %v412 = vcvt.f32.s32 %v409
  %v413 = vcvt.f32.s32 %v411
  %v414 = vshll.u32 %v413, 16
  %v415 = vadd.s32 %v414, %v412
  %vm416 = vcmp.eq.s32.totalorder %v415, %v387
  %v417 = vsel %vm416, %v395, 0.0
  %vm418 = vcmask 1043456
  %v419 = vsel %vm418, %v417, 0.0
  %v420 = vrot.slane %v419, 4
  %v421 = vadd.f32 %v419, %v420
  %v422 = vrot.slane %v421, 2
  %v423 = vadd.f32 %v421, %v422
  %v424 = vrot.slane %v423, 1
  %v425 = vadd.f32 %v423, %v424
  %427 = vset.pattern.permute.xlu0 0
  %428 = vperm.xlu0 %427, %v351
  %v429 = vpop.permute.xlu0 %428
  %v431 = vsel %vm416, %v429, 0.0
  %v432 = vsel %vm418, %v431, 0.0
  %v433 = vrot.slane %v432, 4
  %v434 = vadd.f32 %v432, %v433
  %v435 = vrot.slane %v434, 2
  %v436 = vadd.f32 %v434, %v435
  %v437 = vrot.slane %v436, 1
  %v438 = vadd.f32 %v436, %v437
  %vm439 = vcmask 1040384
  %v440 = vsel %vm439, %v425, %v438
  %v441 = vld [vmem:[%s2 + $0xa] sm:$0x3]
  %v442 = vstv %s15
  %v443 = vmul.f32 %v442, %v441
  %s444 = ssub.f32 1.0, %s15
  %v445 = vstv %s444
  %v446 = vmul.f32 %v445, %v440
  %v447 = vadd.f32 %v443, %v446
  %448 = vst [vmem:[%s3] sm:$0x3] %v447
  // Predicated region
  $region14: #{forward.1} parent=0 // pred_check
    _
  $region15: #{forward.1} parent=0 // pred_check_branch
    %450 = sbr.rel (0) target = $region17
  $region16: #{forward.1} parent=0 // pred_region
    _
  $region17: #{forward.1} parent=0 // pred_fallthru
    _
  // Predicated region
  $region18: #{forward.1} parent=0 // pred_check
    _
  $region19: #{forward.1} parent=0 // pred_check_branch
    %452 = sbr.rel (0) target = $region21
  $region20: #{forward.1} parent=0 // pred_region
    _
  $region21: #{forward.1} parent=0 // pred_fallthru
    _

</llo_original>
